<compile_context>
chip_gen: v7x
topology: tpu7x:2x2x1
jax: 0.10.0
libtpu: 0.0.40
codegen_flags: <defaults>
</compile_context>

<pallas_src>
import jax
import jax.numpy as jnp
from jax.experimental import pallas as pl
from jax.experimental.pallas import tpu as pltpu

_MIB = 1024 * 1024
# Widest lane-dense column counts to try (large multiples of 128 -> unmasked vst stores).
_LANE_CANDIDATES = (2048, 1024, 512, 256, 128)
# Row-tile granularity: multiple of 32 sublanes covers f32 (8,128) / bf16 (16,128) /
# int8-fp8 (32,128) packing constraints.
_SUBLANE_MULTIPLE = 32
# Below this, pallas_call launch + per-step overhead dominates; let XLA fuse instead.
_SMALL_FAST_PATH_BYTES = 256 * 1024


def _hsigmoid_kernel(x_ref, o_ref):
    # relu6(x + 3) / 6 == clamp(x + 3, 0, 6) * (1/6)  — all VPU, computed in f32.
    x = x_ref[...].astype(jnp.float32)
    o_ref[...] = (jnp.clip(x + 3.0, 0.0, 6.0) * (1.0 / 6.0)).astype(o_ref.dtype)


def _hsigmoid_jnp(x: jax.Array) -> jax.Array:
    xf = x.astype(jnp.float32)
    return (jnp.clip(xf + 3.0, 0.0, 6.0) * (1.0 / 6.0)).astype(x.dtype)


def _vmem_capacity_bytes() -> int:
    """Per-TensorCore VMEM capacity; conservative fallback if the query fails."""
    try:
        info = pltpu.get_tpu_info()
        return int(getattr(info, "vmem_capacity_bytes", 64 * _MIB))
    except Exception:
        return 64 * _MIB  # v7x per-TC VMEM (smallest of v5e/v6e/v7x)


def hsigmoid(x: jax.Array, *, force_pallas: bool = False) -> jax.Array:
    """Elementwise hard-sigmoid (relu6(x + 3) / 6) via a Pallas TPU kernel.

    Works for any shape / float dtype. The aligned case (size divisible by 128) is
    completely pad-free: reshape -> kernel -> reshape back, no extra HBM passes.
    `force_pallas=True` bypasses the small-input jnp fast path (used by tests).
    """
    orig_shape = x.shape
    dtype = x.dtype
    n = x.size
    if n == 0:
        return x
    itemsize = jnp.dtype(dtype).itemsize

    # Small-input fast path: XLA fuses the elementwise expression with neighbors,
    # which a standalone kernel cannot; skip pallas launch overhead entirely.
    if not force_pallas and n * itemsize < _SMALL_FAST_PATH_BYTES:
        return _hsigmoid_jnp(x)

    # Widest lane count that divides n exactly -> zero padding.
    cols = next((c for c in _LANE_CANDIDATES if n % c == 0), None)
    if cols is None:
        # Ragged element count: plain jnp is 1 read + 1 write of HBM, strictly better
        # than any pad/slice/concat plumbing (>= 3 passes) around a bandwidth-bound op.
        return _hsigmoid_jnp(x)

    rows = n // cols
    slab = x.reshape(rows, cols)

    # Generation-aware block sizing: ~8 MiB blocks where VMEM allows. Pipelined
    # footprint = 2 arrays (in+out) x 2 buffers x block; degrade if VMEM is smaller.
    vmem_cap = _vmem_capacity_bytes()
    target_block_bytes = min(8 * _MIB, max(_MIB, vmem_cap // 8))

    bytes_per_row = cols * itemsize
    tile_rows = max(
        _SUBLANE_MULTIPLE,
        (target_block_bytes // bytes_per_row) // _SUBLANE_MULTIPLE * _SUBLANE_MULTIPLE,
    )

    if rows <= tile_rows:
        # Single full-array block (always a legal block shape, even if rows % 8 != 0).
        block = (rows, cols)
        grid = (1,)
    else:
        # Even step count balances the "parallel" grid axis across v7x's two TensorCores.
        steps = pl.cdiv(rows, tile_rows)
        if steps % 2:
            steps += 1
        tile_rows = max(
            _SUBLANE_MULTIPLE,
            pl.cdiv(pl.cdiv(rows, steps), _SUBLANE_MULTIPLE) * _SUBLANE_MULTIPLE,
        )
        block = (tile_rows, cols)
        grid = (pl.cdiv(rows, tile_rows),)  # partial last block handled by Pallas

    block_bytes = block[0] * block[1] * itemsize
    # 2 arrays x 2 pipeline buffers + 25% headroom; floor at 16 MiB (v5e default) and
    # cap at 3/4 of physical VMEM so we never overshoot v7x's 64 MiB.
    vmem_limit = min(
        max(int(4 * block_bytes * 1.25), 16 * _MIB),
        max(16 * _MIB, (3 * vmem_cap) // 4),
    )

    out = pl.pallas_call(
        _hsigmoid_kernel,
        out_shape=jax.ShapeDtypeStruct((rows, cols), dtype),
        grid_spec=pltpu.PrefetchScalarGridSpec(
            num_scalar_prefetch=0,
            grid=grid,
            in_specs=[pl.BlockSpec(block, lambda i: (i, 0))],
            out_specs=pl.BlockSpec(block, lambda i: (i, 0)),
        ),
        compiler_params=pltpu.CompilerParams(
            dimension_semantics=("parallel",),
            vmem_limit_bytes=vmem_limit,
        ),
        cost_estimate=pl.CostEstimate(
            flops=4 * n,
            transcendentals=0,
            bytes_accessed=2 * n * itemsize,
        ),
    )(slab)

    return out.reshape(orig_shape)


def hsigmoid_ref(x):
    return jnp.clip(x + 3.0, 0.0, 6.0) / 6.0


if __name__ == "__main__":
    key = jax.random.PRNGKey(0)
    k1, k2, k3, k4 = jax.random.split(key, 4)

    # NCHW activation map, like the PyTorch module would see: batch=2, channels=4, 16x16.
    x = jax.random.normal(k1, (2, 4, 16, 16), dtype=jnp.float32) * 4.0
    y = jax.block_until_ready(hsigmoid(x, force_pallas=True))  # exercise the kernel path
    assert y.shape == x.shape and y.dtype == x.dtype
    assert jnp.allclose(y, hsigmoid_ref(x), atol=1e-6, rtol=1e-6)
    # Default call for this size takes the small-input fast path; results must match.
    y_fast = jax.block_until_ready(hsigmoid(x))
    assert jnp.allclose(y_fast, hsigmoid_ref(x), atol=1e-6, rtol=1e-6)

    # Larger activation map -> multi-step "parallel" grid (even step count for v7x).
    x_big = jax.random.normal(k2, (20, 32, 64, 128), dtype=jnp.float32) * 4.0
    y_big = jax.block_until_ready(hsigmoid(x_big))
    assert y_big.shape == x_big.shape
    assert jnp.allclose(y_big, hsigmoid_ref(x_big), atol=1e-6, rtol=1e-6)

    # Ragged element count (not a multiple of 128) -> pad-free jnp fallback.
    x_r = jax.random.normal(k3, (3, 5, 7), dtype=jnp.float32) * 4.0
    y_r = jax.block_until_ready(hsigmoid(x_r))
    assert y_r.shape == x_r.shape and y_r.dtype == x_r.dtype
    assert jnp.allclose(y_r, hsigmoid_ref(x_r), atol=1e-6, rtol=1e-6)

    # bf16 path through the kernel (internal f32 math, cast back on store).
    x_b = (jax.random.normal(k4, (2, 4, 16, 16), dtype=jnp.float32) * 4.0).astype(jnp.bfloat16)
    y_b = jax.block_until_ready(hsigmoid(x_b, force_pallas=True))
    assert y_b.shape == x_b.shape and y_b.dtype == jnp.bfloat16
    assert jnp.allclose(
        y_b.astype(jnp.float32),
        hsigmoid_ref(x_b.astype(jnp.float32)),
        atol=2e-2,
        rtol=2e-2,
    )

    print("KERNEL_OK")
</pallas_src>

<mosaic_0001>
module attributes {stable_mosaic.version = 11 : i64} {
  func.func @_hsigmoid_kernel(%arg0: i32, %arg1: memref<1x2048xf32, #tpu.memory_space<vmem>>, %arg2: memref<1x2048xf32, #tpu.memory_space<vmem>>) attributes {dimension_semantics = [#tpu.dimension_semantics<parallel>], iteration_bounds = array<i64: 1>, scalar_prefetch = 0 : i64, scratch_operands = 0 : i64, tpu.core_type = #tpu.core_type<tc>, window_params = [{transform_indices = @transform_0, window_bounds = array<i64: 1, 2048>}, {transform_indices = @transform_1, window_bounds = array<i64: 1, 2048>}]} {
    %c0 = arith.constant 0 : index
    %c0_0 = arith.constant 0 : index
    %0 = vector.load %arg1[%c0, %c0_0] : memref<1x2048xf32, #tpu.memory_space<vmem>>, vector<1x2048xf32>
    %cst = arith.constant 3.000000e+00 : f32
    %1 = vector.broadcast %cst : f32 to vector<1x2048xf32>
    %2 = arith.addf %0, %1 : vector<1x2048xf32>
    %cst_1 = arith.constant 0.000000e+00 : f32
    %cst_2 = arith.constant 6.000000e+00 : f32
    %3 = vector.broadcast %cst_1 : f32 to vector<1x2048xf32>
    %4 = arith.maximumf %3, %2 : vector<1x2048xf32>
    %5 = vector.broadcast %cst_2 : f32 to vector<1x2048xf32>
    %6 = arith.minimumf %5, %4 : vector<1x2048xf32>
    %cst_3 = arith.constant 0.166666672 : f32
    %7 = vector.broadcast %cst_3 : f32 to vector<1x2048xf32>
    %8 = arith.mulf %6, %7 : vector<1x2048xf32>
    %c0_4 = arith.constant 0 : index
    %c0_5 = arith.constant 0 : index
    %9 = vector.load %arg2[%c0_4, %c0_5] : memref<1x2048xf32, #tpu.memory_space<vmem>>, vector<1x2048xf32>
    tpu.vector_store %arg2[%c0_4, %c0_5], %8 {strides = array<i32>} : memref<1x2048xf32, #tpu.memory_space<vmem>>, vector<1x2048xf32>,
    return
  }
  func.func @transform_0(%arg0: i32) -> (i32, i32) {
    %c0_i32 = arith.constant 0 : i32
    %c0_i32_0 = arith.constant 0 : i32
    return %arg0, %c0_i32 : i32, i32
  }
  func.func @transform_1(%arg0: i32) -> (i32, i32) {
    %c0_i32 = arith.constant 0 : i32
    %c0_i32_0 = arith.constant 0 : i32
    return %arg0, %c0_i32 : i32, i32
  }
}

</mosaic_0001>

<llo_original>
// kernel: tpu_custom_call.1
$region0: #{tpu_custom_call.1}
  #allocation0 [shape = 'u32[]', space=smem, size = 0x4, offset = 0x4, fixed_abs, tag = 'smem constant byte address 0x4 - core index']
  #allocation1 [shape = 'u32[144,128]{1,0:T(1,128)}', space=vmem, size = 0x12000, scoped, tag = 'internal scratch']
  %s0 = inlined_call_operand.hbm [shape: f32[1,2048], index: 0, kind: input, shape index: {}]
  %s1 = inlined_call_operand.hbm [shape: f32[1,2048], index: 1, kind: output, shape index: {}]
  %s2 = sld [smem:[#allocation0]]
  $region18: #{tpu_custom_call.1} parent=0
    _
  %s4 = ssub.s32 1, %s2
  %s5 = scalar_select 0, %s4, %s2
  $region1: #{tpu_custom_call.1} parent=0
    #allocation2 [shape = 'u8[8192]{0}', space=vmem, size = 0x2000, scoped, tag = 'input window, operand 0, single buffered']
    #allocation3 [shape = 's32[1]{0}', space=sflag, size = 0x4, scoped, tag = 'scoped memory for tpu_custom_call.1']
    #allocation4 [shape = 's32[1]{0}', space=sflag, size = 0x4, scoped, tag = 'scoped memory for tpu_custom_call.1']
    #allocation5 [shape = 'u8[8192]{0}', space=vmem, size = 0x2000, scoped, tag = 'output window, operand 0, single buffered']
    %6 = vsyncpa [#allocation3], 0
    %7 = vsyncpa [#allocation4], 0
    // Predicated region
    $region2: #{tpu_custom_call.1} parent=1 // pred_check
      _
    $region3: #{tpu_custom_call.1} parent=1 // pred_check_branch
      %9 = sbr.rel (0) target = $region5
    $region4: #{tpu_custom_call.1} parent=1 // pred_region
      %s11 = ssub.s32 256, 256
      %12 = vsyncadd [#allocation3], %s11
      %s14 = sshll.u32 [#allocation2], 4
      %s15 = int_to_ptr.vmem [resolvable:$true] %s14
      %17 = dma.hbm_to_vmem [thread:$0]  %s0, 256, %s15, [#allocation3]
    $region5: #{tpu_custom_call.1} parent=1 // pred_fallthru
      _
    // Predicated region
    $region6: #{tpu_custom_call.1} parent=1 // pred_check
      _
    $region7: #{tpu_custom_call.1} parent=1 // pred_check_branch
      %19 = sbr.rel (0) target = $region9
    $region8: #{tpu_custom_call.1} parent=1 // pred_region
      %20 = dma.done [#allocation3], 256
    $region9: #{tpu_custom_call.1} parent=1 // pred_fallthru
      _
    %v21 = vld [vmem:[#allocation2] sm:$0xff]
    %v22 = vld [vmem:[#allocation2 + $0x8] sm:$0xff]
    %v23 = vadd.f32 %v21, 3.0
    %v24 = vadd.f32 %v22, 3.0
    %v25 = vmax.f32 %v23, 0.0
    %v26 = vmax.f32 %v24, 0.0
    %v27 = vmin.f32 %v25, 6.0
    %v28 = vmin.f32 %v26, 6.0
    %v29 = vmul.f32 %v27, 0.16666667
    %v30 = vmul.f32 %v28, 0.16666667
    %31 = vst [vmem:[#allocation5] sm:$0xff] %v29
    %32 = vst [vmem:[#allocation5 + $0x8] sm:$0xff] %v30
    // Predicated region
    $region10: #{tpu_custom_call.1} parent=1 // pred_check
      _
    $region11: #{tpu_custom_call.1} parent=1 // pred_check_branch
      %34 = sbr.rel (0) target = $region13
    $region12: #{tpu_custom_call.1} parent=1 // pred_region
      %s36 = ssub.s32 256, 256
      %37 = vsyncadd [#allocation4], %s36
      %s39 = sshll.u32 [#allocation5], 4
      %s40 = int_to_ptr.vmem [resolvable:$true] %s39
      %42 = dma.vmem_to_hbm [thread:$0]  %s40, 256, %s1, [#allocation4]
    $region13: #{tpu_custom_call.1} parent=1 // pred_fallthru
      _
    // Predicated region
    $region14: #{tpu_custom_call.1} parent=1 // pred_check
      _
    $region15: #{tpu_custom_call.1} parent=1 // pred_check_branch
      %44 = sbr.rel (0) target = $region17
    $region16: #{tpu_custom_call.1} parent=1 // pred_region
      %45 = dma.done [#allocation4], 256
    $region17: #{tpu_custom_call.1} parent=1 // pred_fallthru
      _
    %46 = vsyncpa [#allocation3], 1
    %47 = vsyncpa [#allocation4], 1

</llo_original>
